<compile_context>
chip_gen: v5e
topology: v5e:2x2
jax: 0.10.0
libtpu: 0.0.40
codegen_flags: <defaults>
</compile_context>

<pallas_src>
import jax
import jax.numpy as jnp
from jax.experimental import pallas as pl
from jax.experimental.pallas import tpu as pltpu


def _round_up(x, m):
    return ((x + m - 1) // m) * m


def patch_embed_kernel(x_ref, w_ref, b_ref, o_ref, lhs_ref):
    # x_ref  : (C, TGH, P, Gw, P)  raw image tile (one batch elem, TGH patch rows)
    # w_ref  : (K, Epad)           conv weight flattened to k = c*P*P + ph*P + pw (resident)
    # b_ref  : (1, Epad)           bias (resident)
    # o_ref  : (TGH*Gw, Epad)      flattened output rows for this tile
    # lhs_ref: (TGH*Gw, K)         VMEM scratch: the per-step GEMM LHS
    C, TGH, P, Gw, _ = x_ref.shape

    # Assemble the GEMM LHS with plain slab copies (pure data movement, no
    # in-kernel transpose/reshape): rows (tg*Gw + gw), cols [(c*P+ph)*P, +P)
    # receive the pw-strip of every patch in this gh-row.
    @pl.loop(0, TGH)
    def _(tg):
        row0 = tg * Gw
        for c in range(C):
            for ph in range(P):
                col0 = (c * P + ph) * P
                lhs_ref[pl.ds(row0, Gw), pl.ds(col0, P)] = x_ref[c, tg, ph]

    # One big MXU GEMM: (TGH*Gw, C*P*P) @ (C*P*P, Epad), f32 accumulation.
    acc = jnp.dot(lhs_ref[...], w_ref[...], preferred_element_type=jnp.float32)

    # Bias + cast once per grid step (epilogue); single dense store.
    o_ref[...] = (acc + b_ref[...]).astype(o_ref.dtype)


def _choose_gh_tile(B, C, Gh, Gw, P, itemsize):
    """How many patch rows (gh) each grid step handles."""
    divisors = [d for d in range(Gh, 0, -1) if Gh % d == 0]
    # Output block rows (d*Gw) should be sublane-dense (multiple of 8) unless
    # the tile spans the whole image height (block == full dim is always legal).
    cands = [d for d in divisors if d == Gh or (d * Gw) % 8 == 0]

    def vmem_tile_bytes(d):
        # VMEM layout pads the trailing (Gw, P) dims toward (8, 128) tiles.
        return C * d * P * _round_up(Gw, 8) * _round_up(P, 128) * itemsize

    budget = 4 << 20  # ~4 MiB per in-flight x tile (Pallas double-buffers it)
    fitting = [d for d in cands if vmem_tile_bytes(d) <= budget] or [cands[-1]]
    tile = fitting[0]
    # Keep >= 2 grid steps overall so both v7x TensorCores get work.
    if B * (Gh // tile) < 2:
        smaller = [d for d in fitting if d < tile]
        if smaller:
            tile = smaller[0]
    return tile


def patch_embedding(x, weight, bias, patch_size, *, gh_tile=None):
    """x: [B, C, H, W] (NCHW); weight: [E, C, P, P] (OIHW); bias: [E] -> [B, N, E]."""
    B, C, H, W = x.shape
    E = weight.shape[0]
    P = patch_size
    assert H % P == 0 and W % P == 0
    Gh, Gw = H // P, W // P
    N = Gh * Gw
    K = C * P * P

    # Lane-dense embedding dim (multiple of 128); zero padding sliced off at the end.
    Epad = _round_up(E, 128)

    if gh_tile is None:
        gh_tile = _choose_gh_tile(B, C, Gh, Gw, P, x.dtype.itemsize)
    assert Gh % gh_tile == 0
    TGH = gh_tile
    M = TGH * Gw

    # Metadata-only reshape (no transpose / no HBM copy): [B, C, Gh, P, Gw, P].
    x6 = x.reshape(B, C, Gh, P, Gw, P)

    # Conv weight OIHW [E, C, P, P] -> GEMM RHS (C*P*P, Epad); bias -> (1, Epad).
    w = jnp.transpose(weight, (1, 2, 3, 0)).reshape(K, E)
    if Epad != E:
        w = jnp.pad(w, ((0, 0), (0, Epad - E)))
        bvec = jnp.pad(bias, (0, Epad - E))
    else:
        bvec = bias
    b2d = bvec.reshape(1, Epad)

    cost = pl.CostEstimate(
        flops=2 * B * N * E * K,
        transcendentals=0,
        bytes_accessed=(x.size * x.dtype.itemsize
                        + w.size * w.dtype.itemsize
                        + B * N * Epad * x.dtype.itemsize),
    )

    out = pl.pallas_call(
        patch_embed_kernel,
        out_shape=jax.ShapeDtypeStruct((B, N, Epad), x.dtype),
        grid_spec=pltpu.PrefetchScalarGridSpec(
            num_scalar_prefetch=0,
            grid=(B, Gh // TGH),
            in_specs=[
                # Raw image tile: one batch element, TGH patch-rows of pixels.
                pl.BlockSpec((None, C, TGH, P, Gw, P),
                             lambda bi, gi: (bi, 0, gi, 0, 0, 0)),
                # Flattened weight: constant index_map -> DMA'd once, resident.
                pl.BlockSpec((K, Epad), lambda bi, gi: (0, 0)),
                # Bias: resident.
                pl.BlockSpec((1, Epad), lambda bi, gi: (0, 0)),
            ],
            out_specs=pl.BlockSpec((None, M, Epad),
                                   lambda bi, gi: (bi, gi, 0)),
            scratch_shapes=[pltpu.VMEM((M, K), x.dtype)],
        ),
        compiler_params=pltpu.CompilerParams(
            dimension_semantics=("parallel", "parallel"),
        ),
        cost_estimate=cost,
    )(x6, w, b2d)

    if Epad != E:
        out = out[..., :E]
    return out


def _reference(x, weight, bias, patch_size):
    """Pure-JAX reference using a real strided conv (for verification)."""
    y = jax.lax.conv_general_dilated(
        x, weight,
        window_strides=(patch_size, patch_size),
        padding="VALID",
        dimension_numbers=("NCHW", "OIHW", "NCHW"),
    ) + bias.reshape(1, -1, 1, 1)
    B, E, Gh, Gw = y.shape
    return y.reshape(B, E, Gh * Gw).transpose(0, 2, 1)


if __name__ == "__main__":
    # Small shapes consistent with the module: image_size=16, patch_size=4,
    # in_channels=4, embedding_dim=32  ->  num_patches = 16.
    B, C, H = 2, 4, 16
    P, E = 4, 32

    key = jax.random.PRNGKey(0)
    kx, kw, kb = jax.random.split(key, 3)
    x = jax.random.normal(kx, (B, C, H, H), dtype=jnp.float32)
    # Deterministic parameter init (Conv2d weight OIHW [E, C, P, P], bias [E]).
    weight = jax.random.normal(kw, (E, C, P, P), dtype=jnp.float32) * 0.02
    bias = jax.random.normal(kb, (E,), dtype=jnp.float32) * 0.02

    out = patch_embedding(x, weight, bias, P)
    out = jax.block_until_ready(out)

    ref = _reference(x, weight, bias, P)
    assert out.shape == (B, (H // P) * (H // P), E)
    assert jnp.allclose(out, ref, atol=1e-4, rtol=1e-4)

    print("KERNEL_OK")
</pallas_src>

<mosaic_0001>
module attributes {stable_mosaic.version = 11 : i64} {
  func.func @patch_embed_kernel(%arg0: i32, %arg1: i32, %arg2: memref<1x4x4x4x4x4xf32, #tpu.memory_space<vmem>>, %arg3: memref<64x128xf32, #tpu.memory_space<vmem>>, %arg4: memref<1x128xf32, #tpu.memory_space<vmem>>, %arg5: memref<1x16x128xf32, #tpu.memory_space<vmem>>, %arg6: memref<16x64xf32, #tpu.memory_space<vmem>>) attributes {dimension_semantics = [#tpu.dimension_semantics<parallel>, #tpu.dimension_semantics<parallel>], iteration_bounds = array<i64: 2, 1>, scalar_prefetch = 0 : i64, scratch_operands = 1 : i64, tpu.core_type = #tpu.core_type<tc>, window_params = [{transform_indices = @transform_0, window_bounds = array<i64: 1, 4, 4, 4, 4, 4>}, {pipeline_mode = #tpu.pipeline_mode<synchronous>, transform_indices = @transform_1, window_bounds = array<i64: 64, 128>}, {pipeline_mode = #tpu.pipeline_mode<synchronous>, transform_indices = @transform_2, window_bounds = array<i64: 1, 128>}, {transform_indices = @transform_3, window_bounds = array<i64: 1, 16, 128>}]} {
    %c0_i32 = arith.constant 0 : i32
    %c4_i32 = arith.constant 4 : i32
    %0 = arith.addi %c0_i32, %c4_i32 : i32
    %c1_i32 = arith.constant 1 : i32
    scf.for %arg7 = %c0_i32 to %0 step %c1_i32  : i32 {
      %c1_i32_9 = arith.constant 1 : i32
      %10 = arith.muli %arg7, %c1_i32_9 : i32
      %c0_i32_10 = arith.constant 0 : i32
      %11 = arith.addi %c0_i32_10, %10 : i32
      %c4_i32_11 = arith.constant 4 : i32
      %12 = arith.muli %11, %c4_i32_11 : i32
      %c0_12 = arith.constant 0 : index
      %c0_13 = arith.constant 0 : index
      %13 = arith.index_cast %11 : i32 to index
      %c0_14 = arith.constant 0 : index
      %c0_15 = arith.constant 0 : index
      %c0_16 = arith.constant 0 : index
      %14 = vector.load %arg2[%c0_12, %c0_13, %13, %c0_14, %c0_15, %c0_16] : memref<1x4x4x4x4x4xf32, #tpu.memory_space<vmem>>, vector<1x1x1x1x4x4xf32>
      %15 = vector.shape_cast %14 : vector<1x1x1x1x4x4xf32> to vector<4x4xf32>
      %16 = arith.index_cast %12 : i32 to index
      %c0_17 = arith.constant 0 : index
      %17 = vector.load %arg6[%16, %c0_17] : memref<16x64xf32, #tpu.memory_space<vmem>>, vector<4x4xf32>
      tpu.vector_store %arg6[%16, %c0_17], %15 {strides = array<i32>} : memref<16x64xf32, #tpu.memory_space<vmem>>, vector<4x4xf32>,
      %c0_18 = arith.constant 0 : index
      %c0_19 = arith.constant 0 : index
      %18 = arith.index_cast %11 : i32 to index
      %c1 = arith.constant 1 : index
      %c0_20 = arith.constant 0 : index
      %c0_21 = arith.constant 0 : index
      %19 = vector.load %arg2[%c0_18, %c0_19, %18, %c1, %c0_20, %c0_21] : memref<1x4x4x4x4x4xf32, #tpu.memory_space<vmem>>, vector<1x1x1x1x4x4xf32>
      %20 = vector.shape_cast %19 : vector<1x1x1x1x4x4xf32> to vector<4x4xf32>
      %21 = arith.index_cast %12 : i32 to index
      %c4 = arith.constant 4 : index
      %22 = vector.load %arg6[%21, %c4] : memref<16x64xf32, #tpu.memory_space<vmem>>, vector<4x4xf32>
      tpu.vector_store %arg6[%21, %c4], %20 {strides = array<i32>} : memref<16x64xf32, #tpu.memory_space<vmem>>, vector<4x4xf32>,
      %c0_22 = arith.constant 0 : index
      %c0_23 = arith.constant 0 : index
      %23 = arith.index_cast %11 : i32 to index
      %c2 = arith.constant 2 : index
      %c0_24 = arith.constant 0 : index
      %c0_25 = arith.constant 0 : index
      %24 = vector.load %arg2[%c0_22, %c0_23, %23, %c2, %c0_24, %c0_25] : memref<1x4x4x4x4x4xf32, #tpu.memory_space<vmem>>, vector<1x1x1x1x4x4xf32>
      %25 = vector.shape_cast %24 : vector<1x1x1x1x4x4xf32> to vector<4x4xf32>
      %26 = arith.index_cast %12 : i32 to index
      %c8 = arith.constant 8 : index
      %27 = vector.load %arg6[%26, %c8] : memref<16x64xf32, #tpu.memory_space<vmem>>, vector<4x4xf32>
      tpu.vector_store %arg6[%26, %c8], %25 {strides = array<i32>} : memref<16x64xf32, #tpu.memory_space<vmem>>, vector<4x4xf32>,
      %c0_26 = arith.constant 0 : index
      %c0_27 = arith.constant 0 : index
      %28 = arith.index_cast %11 : i32 to index
      %c3 = arith.constant 3 : index
      %c0_28 = arith.constant 0 : index
      %c0_29 = arith.constant 0 : index
      %29 = vector.load %arg2[%c0_26, %c0_27, %28, %c3, %c0_28, %c0_29] : memref<1x4x4x4x4x4xf32, #tpu.memory_space<vmem>>, vector<1x1x1x1x4x4xf32>
      %30 = vector.shape_cast %29 : vector<1x1x1x1x4x4xf32> to vector<4x4xf32>
      %31 = arith.index_cast %12 : i32 to index
      %c12 = arith.constant 12 : index
      %32 = vector.load %arg6[%31, %c12] : memref<16x64xf32, #tpu.memory_space<vmem>>, vector<4x4xf32>
      tpu.vector_store %arg6[%31, %c12], %30 {strides = array<i32>} : memref<16x64xf32, #tpu.memory_space<vmem>>, vector<4x4xf32>,
      %c0_30 = arith.constant 0 : index
      %c1_31 = arith.constant 1 : index
      %33 = arith.index_cast %11 : i32 to index
      %c0_32 = arith.constant 0 : index
      %c0_33 = arith.constant 0 : index
      %c0_34 = arith.constant 0 : index
      %34 = vector.load %arg2[%c0_30, %c1_31, %33, %c0_32, %c0_33, %c0_34] : memref<1x4x4x4x4x4xf32, #tpu.memory_space<vmem>>, vector<1x1x1x1x4x4xf32>
      %35 = vector.shape_cast %34 : vector<1x1x1x1x4x4xf32> to vector<4x4xf32>
      %36 = arith.index_cast %12 : i32 to index
      %c16 = arith.constant 16 : index
      %37 = vector.load %arg6[%36, %c16] : memref<16x64xf32, #tpu.memory_space<vmem>>, vector<4x4xf32>
      tpu.vector_store %arg6[%36, %c16], %35 {strides = array<i32>} : memref<16x64xf32, #tpu.memory_space<vmem>>, vector<4x4xf32>,
      %c0_35 = arith.constant 0 : index
      %c1_36 = arith.constant 1 : index
      %38 = arith.index_cast %11 : i32 to index
      %c1_37 = arith.constant 1 : index
      %c0_38 = arith.constant 0 : index
      %c0_39 = arith.constant 0 : index
      %39 = vector.load %arg2[%c0_35, %c1_36, %38, %c1_37, %c0_38, %c0_39] : memref<1x4x4x4x4x4xf32, #tpu.memory_space<vmem>>, vector<1x1x1x1x4x4xf32>
      %40 = vector.shape_cast %39 : vector<1x1x1x1x4x4xf32> to vector<4x4xf32>
      %41 = arith.index_cast %12 : i32 to index
      %c20 = arith.constant 20 : index
      %42 = vector.load %arg6[%41, %c20] : memref<16x64xf32, #tpu.memory_space<vmem>>, vector<4x4xf32>
      tpu.vector_store %arg6[%41, %c20], %40 {strides = array<i32>} : memref<16x64xf32, #tpu.memory_space<vmem>>, vector<4x4xf32>,
      %c0_40 = arith.constant 0 : index
      %c1_41 = arith.constant 1 : index
      %43 = arith.index_cast %11 : i32 to index
      %c2_42 = arith.constant 2 : index
      %c0_43 = arith.constant 0 : index
      %c0_44 = arith.constant 0 : index
      %44 = vector.load %arg2[%c0_40, %c1_41, %43, %c2_42, %c0_43, %c0_44] : memref<1x4x4x4x4x4xf32, #tpu.memory_space<vmem>>, vector<1x1x1x1x4x4xf32>
      %45 = vector.shape_cast %44 : vector<1x1x1x1x4x4xf32> to vector<4x4xf32>
      %46 = arith.index_cast %12 : i32 to index
      %c24 = arith.constant 24 : index
      %47 = vector.load %arg6[%46, %c24] : memref<16x64xf32, #tpu.memory_space<vmem>>, vector<4x4xf32>
      tpu.vector_store %arg6[%46, %c24], %45 {strides = array<i32>} : memref<16x64xf32, #tpu.memory_space<vmem>>, vector<4x4xf32>,
      %c0_45 = arith.constant 0 : index
      %c1_46 = arith.constant 1 : index
      %48 = arith.index_cast %11 : i32 to index
      %c3_47 = arith.constant 3 : index
      %c0_48 = arith.constant 0 : index
      %c0_49 = arith.constant 0 : index
      %49 = vector.load %arg2[%c0_45, %c1_46, %48, %c3_47, %c0_48, %c0_49] : memref<1x4x4x4x4x4xf32, #tpu.memory_space<vmem>>, vector<1x1x1x1x4x4xf32>
      %50 = vector.shape_cast %49 : vector<1x1x1x1x4x4xf32> to vector<4x4xf32>
      %51 = arith.index_cast %12 : i32 to index
      %c28 = arith.constant 28 : index
      %52 = vector.load %arg6[%51, %c28] : memref<16x64xf32, #tpu.memory_space<vmem>>, vector<4x4xf32>
      tpu.vector_store %arg6[%51, %c28], %50 {strides = array<i32>} : memref<16x64xf32, #tpu.memory_space<vmem>>, vector<4x4xf32>,
      %c0_50 = arith.constant 0 : index
      %c2_51 = arith.constant 2 : index
      %53 = arith.index_cast %11 : i32 to index
      %c0_52 = arith.constant 0 : index
      %c0_53 = arith.constant 0 : index
      %c0_54 = arith.constant 0 : index
      %54 = vector.load %arg2[%c0_50, %c2_51, %53, %c0_52, %c0_53, %c0_54] : memref<1x4x4x4x4x4xf32, #tpu.memory_space<vmem>>, vector<1x1x1x1x4x4xf32>
      %55 = vector.shape_cast %54 : vector<1x1x1x1x4x4xf32> to vector<4x4xf32>
      %56 = arith.index_cast %12 : i32 to index
      %c32 = arith.constant 32 : index
      %57 = vector.load %arg6[%56, %c32] : memref<16x64xf32, #tpu.memory_space<vmem>>, vector<4x4xf32>
      tpu.vector_store %arg6[%56, %c32], %55 {strides = array<i32>} : memref<16x64xf32, #tpu.memory_space<vmem>>, vector<4x4xf32>,
      %c0_55 = arith.constant 0 : index
      %c2_56 = arith.constant 2 : index
      %58 = arith.index_cast %11 : i32 to index
      %c1_57 = arith.constant 1 : index
      %c0_58 = arith.constant 0 : index
      %c0_59 = arith.constant 0 : index
      %59 = vector.load %arg2[%c0_55, %c2_56, %58, %c1_57, %c0_58, %c0_59] : memref<1x4x4x4x4x4xf32, #tpu.memory_space<vmem>>, vector<1x1x1x1x4x4xf32>
      %60 = vector.shape_cast %59 : vector<1x1x1x1x4x4xf32> to vector<4x4xf32>
      %61 = arith.index_cast %12 : i32 to index
      %c36 = arith.constant 36 : index
      %62 = vector.load %arg6[%61, %c36] : memref<16x64xf32, #tpu.memory_space<vmem>>, vector<4x4xf32>
      tpu.vector_store %arg6[%61, %c36], %60 {strides = array<i32>} : memref<16x64xf32, #tpu.memory_space<vmem>>, vector<4x4xf32>,
      %c0_60 = arith.constant 0 : index
      %c2_61 = arith.constant 2 : index
      %63 = arith.index_cast %11 : i32 to index
      %c2_62 = arith.constant 2 : index
      %c0_63 = arith.constant 0 : index
      %c0_64 = arith.constant 0 : index
      %64 = vector.load %arg2[%c0_60, %c2_61, %63, %c2_62, %c0_63, %c0_64] : memref<1x4x4x4x4x4xf32, #tpu.memory_space<vmem>>, vector<1x1x1x1x4x4xf32>
      %65 = vector.shape_cast %64 : vector<1x1x1x1x4x4xf32> to vector<4x4xf32>
      %66 = arith.index_cast %12 : i32 to index
      %c40 = arith.constant 40 : index
      %67 = vector.load %arg6[%66, %c40] : memref<16x64xf32, #tpu.memory_space<vmem>>, vector<4x4xf32>
      tpu.vector_store %arg6[%66, %c40], %65 {strides = array<i32>} : memref<16x64xf32, #tpu.memory_space<vmem>>, vector<4x4xf32>,
      %c0_65 = arith.constant 0 : index
      %c2_66 = arith.constant 2 : index
      %68 = arith.index_cast %11 : i32 to index
      %c3_67 = arith.constant 3 : index
      %c0_68 = arith.constant 0 : index
      %c0_69 = arith.constant 0 : index
      %69 = vector.load %arg2[%c0_65, %c2_66, %68, %c3_67, %c0_68, %c0_69] : memref<1x4x4x4x4x4xf32, #tpu.memory_space<vmem>>, vector<1x1x1x1x4x4xf32>
      %70 = vector.shape_cast %69 : vector<1x1x1x1x4x4xf32> to vector<4x4xf32>
      %71 = arith.index_cast %12 : i32 to index
      %c44 = arith.constant 44 : index
      %72 = vector.load %arg6[%71, %c44] : memref<16x64xf32, #tpu.memory_space<vmem>>, vector<4x4xf32>
      tpu.vector_store %arg6[%71, %c44], %70 {strides = array<i32>} : memref<16x64xf32, #tpu.memory_space<vmem>>, vector<4x4xf32>,
      %c0_70 = arith.constant 0 : index
      %c3_71 = arith.constant 3 : index
      %73 = arith.index_cast %11 : i32 to index
      %c0_72 = arith.constant 0 : index
      %c0_73 = arith.constant 0 : index
      %c0_74 = arith.constant 0 : index
      %74 = vector.load %arg2[%c0_70, %c3_71, %73, %c0_72, %c0_73, %c0_74] : memref<1x4x4x4x4x4xf32, #tpu.memory_space<vmem>>, vector<1x1x1x1x4x4xf32>
      %75 = vector.shape_cast %74 : vector<1x1x1x1x4x4xf32> to vector<4x4xf32>
      %76 = arith.index_cast %12 : i32 to index
      %c48 = arith.constant 48 : index
      %77 = vector.load %arg6[%76, %c48] : memref<16x64xf32, #tpu.memory_space<vmem>>, vector<4x4xf32>
      tpu.vector_store %arg6[%76, %c48], %75 {strides = array<i32>} : memref<16x64xf32, #tpu.memory_space<vmem>>, vector<4x4xf32>,
      %c0_75 = arith.constant 0 : index
      %c3_76 = arith.constant 3 : index
      %78 = arith.index_cast %11 : i32 to index
      %c1_77 = arith.constant 1 : index
      %c0_78 = arith.constant 0 : index
      %c0_79 = arith.constant 0 : index
      %79 = vector.load %arg2[%c0_75, %c3_76, %78, %c1_77, %c0_78, %c0_79] : memref<1x4x4x4x4x4xf32, #tpu.memory_space<vmem>>, vector<1x1x1x1x4x4xf32>
      %80 = vector.shape_cast %79 : vector<1x1x1x1x4x4xf32> to vector<4x4xf32>
      %81 = arith.index_cast %12 : i32 to index
      %c52 = arith.constant 52 : index
      %82 = vector.load %arg6[%81, %c52] : memref<16x64xf32, #tpu.memory_space<vmem>>, vector<4x4xf32>
      tpu.vector_store %arg6[%81, %c52], %80 {strides = array<i32>} : memref<16x64xf32, #tpu.memory_space<vmem>>, vector<4x4xf32>,
      %c0_80 = arith.constant 0 : index
      %c3_81 = arith.constant 3 : index
      %83 = arith.index_cast %11 : i32 to index
      %c2_82 = arith.constant 2 : index
      %c0_83 = arith.constant 0 : index
      %c0_84 = arith.constant 0 : index
      %84 = vector.load %arg2[%c0_80, %c3_81, %83, %c2_82, %c0_83, %c0_84] : memref<1x4x4x4x4x4xf32, #tpu.memory_space<vmem>>, vector<1x1x1x1x4x4xf32>
      %85 = vector.shape_cast %84 : vector<1x1x1x1x4x4xf32> to vector<4x4xf32>
      %86 = arith.index_cast %12 : i32 to index
      %c56 = arith.constant 56 : index
      %87 = vector.load %arg6[%86, %c56] : memref<16x64xf32, #tpu.memory_space<vmem>>, vector<4x4xf32>
      tpu.vector_store %arg6[%86, %c56], %85 {strides = array<i32>} : memref<16x64xf32, #tpu.memory_space<vmem>>, vector<4x4xf32>,
      %c0_85 = arith.constant 0 : index
      %c3_86 = arith.constant 3 : index
      %88 = arith.index_cast %11 : i32 to index
      %c3_87 = arith.constant 3 : index
      %c0_88 = arith.constant 0 : index
      %c0_89 = arith.constant 0 : index
      %89 = vector.load %arg2[%c0_85, %c3_86, %88, %c3_87, %c0_88, %c0_89] : memref<1x4x4x4x4x4xf32, #tpu.memory_space<vmem>>, vector<1x1x1x1x4x4xf32>
      %90 = vector.shape_cast %89 : vector<1x1x1x1x4x4xf32> to vector<4x4xf32>
      %91 = arith.index_cast %12 : i32 to index
      %c60 = arith.constant 60 : index
      %92 = vector.load %arg6[%91, %c60] : memref<16x64xf32, #tpu.memory_space<vmem>>, vector<4x4xf32>
      tpu.vector_store %arg6[%91, %c60], %90 {strides = array<i32>} : memref<16x64xf32, #tpu.memory_space<vmem>>, vector<4x4xf32>,
    }
    %c4_i32_0 = arith.constant 4 : i32
    %c0 = arith.constant 0 : index
    %c0_1 = arith.constant 0 : index
    %1 = vector.load %arg6[%c0, %c0_1] : memref<16x64xf32, #tpu.memory_space<vmem>>, vector<16x64xf32>
    %c0_2 = arith.constant 0 : index
    %c0_3 = arith.constant 0 : index
    %2 = vector.load %arg3[%c0_2, %c0_3] : memref<64x128xf32, #tpu.memory_space<vmem>>, vector<64x128xf32>
    %cst = arith.constant dense<0.000000e+00> : vector<16x128xf32>
    %3 = tpu.matmul %1, %2, %cst {dimension_numbers = #tpu.dot_dimension_numbers<[1], [0], [0], [1], [0, 0, 1, 1], [], []>} : vector<16x64xf32>, vector<64x128xf32>, vector<16x128xf32> -> vector<16x128xf32>
    %c0_4 = arith.constant 0 : index
    %c0_5 = arith.constant 0 : index
    %4 = vector.load %arg4[%c0_4, %c0_5] : memref<1x128xf32, #tpu.memory_space<vmem>>, vector<1x128xf32>
    %5 = vector.broadcast %4 : vector<1x128xf32> to vector<16x128xf32>
    %6 = arith.addf %3, %5 : vector<16x128xf32>
    %c0_6 = arith.constant 0 : index
    %c0_7 = arith.constant 0 : index
    %c0_8 = arith.constant 0 : index
    %7 = vector.load %arg5[%c0_6, %c0_7, %c0_8] : memref<1x16x128xf32, #tpu.memory_space<vmem>>, vector<1x16x128xf32>
    %8 = vector.shape_cast %7 : vector<1x16x128xf32> to vector<16x128xf32>
    %9 = vector.shape_cast %6 : vector<16x128xf32> to vector<1x16x128xf32>
    tpu.vector_store %arg5[%c0_6, %c0_7, %c0_8], %9 {strides = array<i32>} : memref<1x16x128xf32, #tpu.memory_space<vmem>>, vector<1x16x128xf32>,
    return
  }
  func.func @transform_0(%arg0: i32, %arg1: i32) -> (i32, i32, i32, i32, i32, i32) {
    %c0_i32 = arith.constant 0 : i32
    %c0_i32_0 = arith.constant 0 : i32
    %c0_i32_1 = arith.constant 0 : i32
    %c0_i32_2 = arith.constant 0 : i32
    %c0_i32_3 = arith.constant 0 : i32
    return %arg0, %c0_i32, %arg1, %c0_i32_0, %c0_i32_1, %c0_i32_2 : i32, i32, i32, i32, i32, i32
  }
  func.func @transform_1(%arg0: i32, %arg1: i32) -> (i32, i32) {
    %c0_i32 = arith.constant 0 : i32
    %c0_i32_0 = arith.constant 0 : i32
    %c0_i32_1 = arith.constant 0 : i32
    return %c0_i32, %c0_i32_0 : i32, i32
  }
  func.func @transform_2(%arg0: i32, %arg1: i32) -> (i32, i32) {
    %c0_i32 = arith.constant 0 : i32
    %c0_i32_0 = arith.constant 0 : i32
    %c0_i32_1 = arith.constant 0 : i32
    return %c0_i32, %c0_i32_0 : i32, i32
  }
  func.func @transform_3(%arg0: i32, %arg1: i32) -> (i32, i32, i32) {
    %c0_i32 = arith.constant 0 : i32
    %c0_i32_0 = arith.constant 0 : i32
    return %arg0, %arg1, %c0_i32 : i32, i32, i32
  }
}

</mosaic_0001>

<llo_original>
// kernel: tpu_custom_call.1
$region0: #{tpu_custom_call.1}
  #allocation0 [shape = 'u32[]', space=smem, size = 0x4, offset = 0x4, fixed_abs, tag = 'smem constant byte address 0x4 - core index']
  #allocation1 [shape = 'u32[72,128]{1,0:T(1,128)}', space=vmem, size = 0x9000, scoped, tag = 'internal scratch']
  #allocation2 [shape = 'f32[16,64]{1,0:T(8,128)}', space=vmem, size = 0x2000, scoped, tag = 'scratch operand']
  %s0 = inlined_call_operand.hbm [shape: f32[2,4,4,4,4,4], index: 0, kind: input, shape index: {}]
  %s1 = inlined_call_operand.hbm [shape: f32[64,128], index: 1, kind: input, shape index: {}]
  %s2 = inlined_call_operand.vmem [shape: f32[1,128], index: 2, kind: input, shape index: {}]
  %s3 = inlined_call_operand.hbm [shape: f32[2,16,128], index: 3, kind: output, shape index: {}]
  %s4 = sld [smem:[#allocation0]]
  $region60: #{tpu_custom_call.1} parent=0
    _
  %s6 = ssub.s32 1, %s4
  %s7 = scalar_select 0, %s6, %s4
  $region1: #{tpu_custom_call.1} parent=0
    #allocation3 [shape = 'u8[262144]{0}', space=vmem, size = 0x40000, scoped, tag = 'input window, operand 0']
    #allocation4 [shape = 's32[2]{0}', space=sflag, size = 0x8, scoped, tag = 'scoped memory for tpu_custom_call.1']
    #allocation5 [shape = 's32[2]{0}', space=sflag, size = 0x8, scoped, tag = 'scoped memory for tpu_custom_call.1']
    #allocation6 [shape = 'u8[32768]{0}', space=vmem, size = 0x8000, scoped, tag = 'input window, operand 1, single buffered']
    #allocation7 [shape = 's32[1]{0}', space=sflag, size = 0x4, scoped, tag = 'scoped memory for tpu_custom_call.1']
    #allocation8 [shape = 'u8[16384]{0}', space=vmem, size = 0x4000, scoped, tag = 'output window, operand 0']
    %8 = vsyncpa [#allocation4], 0
    %s9 = scalar_lea.sflag [#allocation4], 1
    %10 = vsyncpa %s9, 0
    %11 = vsyncpa [#allocation7], 0
    %12 = vsyncpa [#allocation5], 0
    %s13 = scalar_lea.sflag [#allocation5], 1
    %14 = vsyncpa %s13, 0
    loop: start=0, step=1, limit=4
    $region2: #{tpu_custom_call.1} parent=1 // loop_pre_header
      _
    $region3: #{tpu_custom_call.1} parent=1 // loop_header
      %s16 = sphi 0, %s20
      %p17 = scmp.ge.s32.totalorder %s16, 4
      %s23 = sphi 0, %s35
      %s24 = sphi 0, %s31
      %s25 = sphi 0, %s23
      %s26 = sphi 0, %s24
      %s27 = sphi 0, %s25
      %s28 = sphi 0, %s26
      %s40 = sphi 0, %s42
      %s43 = sphi 0, %s40
      %s44 = sphi 0, %s43
      %s60 = sphi 0, %s44
      %s64 = sphi 0, %s64
      %s66 = sphi 0, %s64
      %s67 = sphi 0, %s66
      %s81 = sphi 0, %s67
      %s85 = sphi 0, %s85
      %s87 = sphi 0, %s85
      %s88 = sphi 0, %s87
      %s102 = sphi 0, %s88
      %s110 = sphi 0, %s112
      %s113 = sphi 0, %s110
      %s114 = sphi 0, %s113
      %s130 = sphi 0, %s114
    $region4: #{tpu_custom_call.1} parent=1 // loop_header_branch
      %19 = sbr.rel (%p17) target = $region8
    $region5: #{tpu_custom_call.1} parent=1 // loop_body
      %s21 = ssub.s32 %s16, 1
      %s22 = ssub.s32 %s16, 2
      %s29 = sadd.s32 1, %s24
      %p30 = scmp.ge.s32.totalorder %s29, 1
      %s31 = scalar_select %p30, 0, %s29
      %s32 = sadd.s32 1, %s23
      %s33 = scalar_select %p30, %s32, %s23
      %p34 = scmp.ge.s32.totalorder %s33, 2
      %s35 = scalar_select %p34, 0, %s33
      %s36 = ssub.s32 %s23, %s35
      %s37 = ssub.s32 %s24, %s31
      %s38 = sor.u32 %s36, %s37
      %p39 = scmp.eq.s32.totalorder %s38, 0
      %s41 = sadd.s32 %s40, 1
      %s42 = scalar_select %p39, %s40, %s41
      %p45 = pneg %p39
      %p46 = scmp.eq.s32.totalorder %s16, 1
      %p47 = por %p45, %p46
      %p48 = scmp.ne.s32.totalorder %s40, %s43
      %p49 = scmp.eq.s32.totalorder %s16, 0
      %p50 = por %p48, %p49
      %p51 = scmp.ne.s32.totalorder %s40, %s43
      %p52 = scmp.eq.s32.totalorder %s21, 1
      %p53 = por %p51, %p52
      %p54 = scmp.ne.s32.totalorder %s43, %s44
      %p55 = scmp.eq.s32.totalorder %s21, 0
      %p56 = por %p54, %p55
      %p57 = scmp.ne.s32.totalorder %s43, %s44
      %p58 = scmp.eq.s32.totalorder %s22, 1
      %p59 = por %p57, %p58
      %p61 = scmp.ne.s32.totalorder %s44, %s60
      %p62 = scmp.eq.s32.totalorder %s22, 0
      %p63 = por %p61, %p62
      %s65 = sadd.s32 %s64, 1
      %p68 = scmp.eq.s32.totalorder %s16, 1
      %p69 = scmp.ne.s32.totalorder %s64, %s66
      %p70 = scmp.eq.s32.totalorder %s16, 0
      %p71 = por %p69, %p70
      %p72 = scmp.ne.s32.totalorder %s64, %s66
      %p73 = scmp.eq.s32.totalorder %s21, 1
      %p74 = por %p72, %p73
      %p75 = scmp.ne.s32.totalorder %s66, %s67
      %p76 = scmp.eq.s32.totalorder %s21, 0
      %p77 = por %p75, %p76
      %p78 = scmp.ne.s32.totalorder %s66, %s67
      %p79 = scmp.eq.s32.totalorder %s22, 1
      %p80 = por %p78, %p79
      %p82 = scmp.ne.s32.totalorder %s67, %s81
      %p83 = scmp.eq.s32.totalorder %s22, 0
      %p84 = por %p82, %p83
      %s86 = sadd.s32 %s85, 1
      %p89 = scmp.eq.s32.totalorder %s16, 1
      %p90 = scmp.ne.s32.totalorder %s85, %s87
      %p91 = scmp.eq.s32.totalorder %s16, 0
      %p92 = por %p90, %p91
      %p93 = scmp.ne.s32.totalorder %s85, %s87
      %p94 = scmp.eq.s32.totalorder %s21, 1
      %p95 = por %p93, %p94
      %p96 = scmp.ne.s32.totalorder %s87, %s88
      %p97 = scmp.eq.s32.totalorder %s21, 0
      %p98 = por %p96, %p97
      %p99 = scmp.ne.s32.totalorder %s87, %s88
      %p100 = scmp.eq.s32.totalorder %s22, 1
      %p101 = por %p99, %p100
      %p103 = scmp.ne.s32.totalorder %s88, %s102
      %p104 = scmp.eq.s32.totalorder %s22, 0
      %p105 = por %p103, %p104
      %s106 = ssub.s32 %s23, %s35
      %s107 = ssub.s32 %s24, %s31
      %s108 = sor.u32 %s106, %s107
      %p109 = scmp.eq.s32.totalorder %s108, 0
      %s111 = sadd.s32 %s110, 1
      %s112 = scalar_select %p109, %s110, %s111
      %p115 = pneg %p109
      %p116 = scmp.eq.s32.totalorder %s16, 1
      %p117 = por %p115, %p116
      %p118 = scmp.ne.s32.totalorder %s110, %s113
      %p119 = scmp.eq.s32.totalorder %s16, 0
      %p120 = por %p118, %p119
      %p121 = scmp.ne.s32.totalorder %s110, %s113
      %p122 = scmp.eq.s32.totalorder %s21, 1
      %p123 = por %p121, %p122
      %p124 = scmp.ne.s32.totalorder %s113, %s114
      %p125 = scmp.eq.s32.totalorder %s21, 0
      %p126 = por %p124, %p125
      %p127 = scmp.ne.s32.totalorder %s113, %s114
      %p128 = scmp.eq.s32.totalorder %s22, 1
      %p129 = por %p127, %p128
      %p131 = scmp.ne.s32.totalorder %s114, %s130
      %p132 = scmp.eq.s32.totalorder %s22, 0
      %p133 = por %p131, %p132
      %p134 = scmp.le.s32.totalorder 1, %s16
      %p135 = scmp.lt.s32.totalorder %s16, 3
      %p136 = pnand %p134, %p135
      %p137 = pneg %p136
      // Predicated region
      $region9: #{tpu_custom_call.1} parent=5 // pred_check
        _
      $region10: #{tpu_custom_call.1} parent=5 // pred_check_branch
        %139 = sbr.rel (%p136) target = $region12
      $region11: #{tpu_custom_call.1} parent=5 // pred_region
        %s140 = ssub.s32 %s16, 1
        // Predicated region
        $region13: #{tpu_custom_call.1} parent=11 // pred_check
          %p141 = pneg %p77
        $region14: #{tpu_custom_call.1} parent=11 // pred_check_branch
          %143 = sbr.rel (%p141) target = $region16
        $region15: #{tpu_custom_call.1} parent=11 // pred_region
          %145 = vsyncadd [#allocation7], 0
          %s146 = sshll.u32 %s1, 4
          %s147 = int_to_ptr.hbm [resolvable:$true] %s146
          %s148 = sshll.u32 [#allocation6], 4
          %s149 = int_to_ptr.vmem [resolvable:$true] %s148
          %154 = dma.hbm_to_vmem [thread:$0]  %s147, 1024, %s149, [#allocation7], 128, 128, 8
        $region16: #{tpu_custom_call.1} parent=11 // pred_fallthru
          _
        // Predicated region
        $region17: #{tpu_custom_call.1} parent=11 // pred_check
          %p155 = pneg %p98
        $region18: #{tpu_custom_call.1} parent=11 // pred_check_branch
          %157 = sbr.rel (%p155) target = $region20
        $region19: #{tpu_custom_call.1} parent=11 // pred_region
          _
        $region20: #{tpu_custom_call.1} parent=11 // pred_fallthru
          _
      $region12: #{tpu_custom_call.1} parent=5 // pred_fallthru
        _
      %p158 = scmp.lt.s32.totalorder %s16, 2
      // Predicated region
      $region21: #{tpu_custom_call.1} parent=5 // pred_check
        %p159 = pneg %p158
      $region22: #{tpu_custom_call.1} parent=5 // pred_check_branch
        %161 = sbr.rel (%p159) target = $region24
      $region23: #{tpu_custom_call.1} parent=5 // pred_region
        // Predicated region
        $region25: #{tpu_custom_call.1} parent=23 // pred_check
          %p162 = pneg %p50
        $region26: #{tpu_custom_call.1} parent=23 // pred_check_branch
          %164 = sbr.rel (%p162) target = $region28
        $region27: #{tpu_custom_call.1} parent=23 // pred_region
          %s165 = sand.u32 %s40, 1
          %s166 = scalar_lea.sflag [#allocation4], %s165
          %s167 = sand.u32 %s40, 1
          %s168 = smul.addr %s167, 256
          %s169 = scalar_lea.vmem [#allocation3], %s168
          %s170 = smul.u32 4, %s24
          %172 = vsyncadd %s166, 0
          %s173 = smul.addr %s170, 4
          %s174 = smul.addr %s23, 64
          %s175 = sadd.s32 %s173, %s174
          %s176 = smul.addr %s175, 4
          %s177 = scalar_lea.hbm %s0, %s176
          %s178 = sshll.u32 %s177, 4
          %s179 = int_to_ptr.hbm [resolvable:$true] %s178
          %s180 = sshll.u32 %s169, 4
          %s181 = int_to_ptr.vmem [resolvable:$true] %s180
          %186 = dma.hbm_to_vmem [thread:$0]  %s179, 4096, %s181, %s166, 64, 64, 4
        $region28: #{tpu_custom_call.1} parent=23 // pred_fallthru
          _
      $region24: #{tpu_custom_call.1} parent=5 // pred_fallthru
        _
      %p187 = scmp.le.s32.totalorder 1, %s16
      %p188 = scmp.lt.s32.totalorder %s16, 3
      %p189 = pnand %p187, %p188
      %p190 = pneg %p189
      // Predicated region
      $region29: #{tpu_custom_call.1} parent=5 // pred_check
        _
      $region30: #{tpu_custom_call.1} parent=5 // pred_check_branch
        %192 = sbr.rel (%p189) target = $region32
      $region31: #{tpu_custom_call.1} parent=5 // pred_region
        %s193 = ssub.s32 %s16, 1
        %s194 = sand.u32 %s43, 1
        %s195 = scalar_lea.sflag [#allocation4], %s194
        %s196 = sand.u32 %s43, 1
        %s197 = smul.addr %s196, 256
        %s198 = scalar_lea.vmem [#allocation3], %s197
        // Predicated region
        $region33: #{tpu_custom_call.1} parent=31 // pred_check
          %p199 = pneg %p56
        $region34: #{tpu_custom_call.1} parent=31 // pred_check_branch
          %201 = sbr.rel (%p199) target = $region36
        $region35: #{tpu_custom_call.1} parent=31 // pred_region
          %203 = dma.done %s195, 4096
        $region36: #{tpu_custom_call.1} parent=31 // pred_fallthru
          _
        // Predicated region
        $region37: #{tpu_custom_call.1} parent=31 // pred_check
          %p204 = pneg %p77
        $region38: #{tpu_custom_call.1} parent=31 // pred_check_branch
          %206 = sbr.rel (%p204) target = $region40
        $region39: #{tpu_custom_call.1} parent=31 // pred_region
          %208 = dma.done [#allocation7], 1024
        $region40: #{tpu_custom_call.1} parent=31 // pred_fallthru
          _
        %s209 = sand.u32 %s43, 1
        %s210 = scalar_lea.sflag [#allocation4], %s209
        %s211 = sand.u32 %s43, 1
        %s212 = smul.addr %s211, 256
        %s213 = scalar_lea.vmem [#allocation3], %s212
        %p214 = pneg %p56
        %p215 = pneg %p53
        %p216 = pneg %p77
        %p217 = pneg %p74
        %p218 = pneg %p98
        %p219 = pneg %p95
        %p220 = pneg %p126
        %p221 = pneg %p123
        %s222 = sand.u32 %s113, 1
        %s223 = scalar_lea.sflag [#allocation5], %s222
        %s224 = sand.u32 %s113, 1
        %s225 = smul.addr %s224, 16
        %s226 = scalar_lea.vmem [#allocation8], %s225
        %s227 = smul.u32 4, %s26
        %s228 = smul.u32 2, %s26
        loop: start=0, step=1, limit=4
        $region41: #{tpu_custom_call.1} parent=31 // loop_pre_header
          _
        $region42: #{tpu_custom_call.1} parent=31 // loop_header
          %s230 = sphi 0, %s234
          %p231 = scmp.ge.s32.totalorder %s230, 4
        $region43: #{tpu_custom_call.1} parent=31 // loop_header_branch
          %233 = sbr.rel (%p231) target = $region47
        $region44: #{tpu_custom_call.1} parent=31 // loop_body
          %s235 = smul.u32 %s230, 4
          %s236 = smul.u32 %s230, 16
          %s237 = scalar_lea.vmem %s198, %s236 [#allocation3]
          %v238 = vld [vmem:[%s237] sm:$0xf]
          %s239 = scalar_lea.vmem [#allocation2], %s235
          %vm240 = vcmask 27648
          %241 = vst.msk [vmem:[%s239] sm:$0xf] %vm240, %v238
          %s242 = sadd.s32 4, %s236
          %s243 = scalar_lea.vmem %s198, %s242 [#allocation3]
          %v244 = vld [vmem:[%s243] sm:$0xf]
          %246 = vrot.lane.b32.xlu0 %v244, 4
          %v247 = vpop.permute.xlu0 %246
          %vm249 = vcmask 60448
          %250 = vst.msk [vmem:[%s239] sm:$0xf] %vm249, %v247
          %s251 = sadd.s32 8, %s236
          %s252 = scalar_lea.vmem %s198, %s251 [#allocation3]
          %v253 = vld [vmem:[%s252] sm:$0xf]
          %255 = vrot.lane.b32.xlu0 %v253, 8
          %v256 = vpop.permute.xlu0 %255
          %vm258 = vcmask 93248
          %259 = vst.msk [vmem:[%s239] sm:$0xf] %vm258, %v256
          %s260 = sadd.s32 12, %s236
          %s261 = scalar_lea.vmem %s198, %s260 [#allocation3]
          %v262 = vld [vmem:[%s261] sm:$0xf]
          %264 = vrot.lane.b32.xlu0 %v262, 12
          %v265 = vpop.permute.xlu0 %264
          %vm267 = vcmask 126048
          %268 = vst.msk [vmem:[%s239] sm:$0xf] %vm267, %v265
          %s269 = sadd.s32 %s236, 64
          %s270 = scalar_lea.vmem %s198, %s269 [#allocation3]
          %v271 = vld [vmem:[%s270] sm:$0xf]
          %273 = vrot.lane.b32.xlu0 %v271, 16
          %v274 = vpop.permute.xlu0 %273
          %vm276 = vcmask 158848
          %277 = vst.msk [vmem:[%s239] sm:$0xf] %vm276, %v274
          %s278 = sadd.s32 %s242, 64
          %s279 = scalar_lea.vmem %s198, %s278 [#allocation3]
          %v280 = vld [vmem:[%s279] sm:$0xf]
          %282 = vrot.lane.b32.xlu0 %v280, 20
          %v283 = vpop.permute.xlu0 %282
          %vm285 = vcmask 191648
          %286 = vst.msk [vmem:[%s239] sm:$0xf] %vm285, %v283
          %s287 = sadd.s32 %s251, 64
          %s288 = scalar_lea.vmem %s198, %s287 [#allocation3]
          %v289 = vld [vmem:[%s288] sm:$0xf]
          %291 = vrot.lane.b32.xlu0 %v289, 24
          %v292 = vpop.permute.xlu0 %291
          %vm294 = vcmask 224448
          %295 = vst.msk [vmem:[%s239] sm:$0xf] %vm294, %v292
          %s296 = sadd.s32 %s260, 64
          %s297 = scalar_lea.vmem %s198, %s296 [#allocation3]
          %v298 = vld [vmem:[%s297] sm:$0xf]
          %300 = vrot.lane.b32.xlu0 %v298, 28
          %v301 = vpop.permute.xlu0 %300
          %vm303 = vcmask 257248
          %304 = vst.msk [vmem:[%s239] sm:$0xf] %vm303, %v301
          %s305 = sadd.s32 %s236, 128
          %s306 = scalar_lea.vmem %s198, %s305 [#allocation3]
          %v307 = vld [vmem:[%s306] sm:$0xf]
          %309 = vrot.lane.b32.xlu0 %v307, 32
          %v310 = vpop.permute.xlu0 %309
          %vm312 = vcmask 290048
          %313 = vst.msk [vmem:[%s239] sm:$0xf] %vm312, %v310
          %s314 = sadd.s32 %s242, 128
          %s315 = scalar_lea.vmem %s198, %s314 [#allocation3]
          %v316 = vld [vmem:[%s315] sm:$0xf]
          %318 = vrot.lane.b32.xlu0 %v316, 36
          %v319 = vpop.permute.xlu0 %318
          %vm321 = vcmask 322848
          %322 = vst.msk [vmem:[%s239] sm:$0xf] %vm321, %v319
          %s323 = sadd.s32 %s251, 128
          %s324 = scalar_lea.vmem %s198, %s323 [#allocation3]
          %v325 = vld [vmem:[%s324] sm:$0xf]
          %327 = vrot.lane.b32.xlu0 %v325, 40
          %v328 = vpop.permute.xlu0 %327
          %vm330 = vcmask 355648
          %331 = vst.msk [vmem:[%s239] sm:$0xf] %vm330, %v328
          %s332 = sadd.s32 %s260, 128
          %s333 = scalar_lea.vmem %s198, %s332 [#allocation3]
          %v334 = vld [vmem:[%s333] sm:$0xf]
          %336 = vrot.lane.b32.xlu0 %v334, 44
          %v337 = vpop.permute.xlu0 %336
          %vm339 = vcmask 388448
          %340 = vst.msk [vmem:[%s239] sm:$0xf] %vm339, %v337
          %s341 = sadd.s32 %s236, 192
          %s342 = scalar_lea.vmem %s198, %s341 [#allocation3]
          %v343 = vld [vmem:[%s342] sm:$0xf]
          %345 = vrot.lane.b32.xlu0 %v343, 48
          %v346 = vpop.permute.xlu0 %345
          %vm348 = vcmask 421248
          %349 = vst.msk [vmem:[%s239] sm:$0xf] %vm348, %v346
          %s350 = sadd.s32 %s242, 192
          %s351 = scalar_lea.vmem %s198, %s350 [#allocation3]
          %v352 = vld [vmem:[%s351] sm:$0xf]
          %354 = vrot.lane.b32.xlu0 %v352, 52
          %v355 = vpop.permute.xlu0 %354
          %vm357 = vcmask 454048
          %358 = vst.msk [vmem:[%s239] sm:$0xf] %vm357, %v355
          %s359 = sadd.s32 %s251, 192
          %s360 = scalar_lea.vmem %s198, %s359 [#allocation3]
          %v361 = vld [vmem:[%s360] sm:$0xf]
          %363 = vrot.lane.b32.xlu0 %v361, 56
          %v364 = vpop.permute.xlu0 %363
          %vm366 = vcmask 486848
          %367 = vst.msk [vmem:[%s239] sm:$0xf] %vm366, %v364
          %s368 = sadd.s32 %s260, 192
          %s369 = scalar_lea.vmem %s198, %s368 [#allocation3]
          %v370 = vld [vmem:[%s369] sm:$0xf]
          %372 = vrot.lane.b32.xlu0 %v370, 60
          %v373 = vpop.permute.xlu0 %372
          %vm375 = vcmask 519648
          %376 = vst.msk [vmem:[%s239] sm:$0xf] %vm375, %v373
        $region45: #{tpu_custom_call.1} parent=31 // loop_footer
          %s234 = sadd.s32 1, %s230
        $region46: #{tpu_custom_call.1} parent=31 // loop_footer_branch
          %229 = sbr.rel target = $region42
        $region47: #{tpu_custom_call.1} parent=31 // loop_exit
          _
        %v377 = vld [vmem:[#allocation2] sm:$0xff]
        %v378 = vld [vmem:[#allocation2 + $0x8] sm:$0xff]
        %v379 = vld [vmem:[#allocation6] sm:$0xff]
        %v380 = vld [vmem:[#allocation6 + $0x8] sm:$0xff]
        %v381 = vld [vmem:[#allocation6 + $0x10] sm:$0xff]
        %v382 = vld [vmem:[#allocation6 + $0x18] sm:$0xff]
        %v383 = vld [vmem:[#allocation6 + $0x20] sm:$0xff]
        %v384 = vld [vmem:[#allocation6 + $0x28] sm:$0xff]
        %v385 = vld [vmem:[#allocation6 + $0x30] sm:$0xff]
        %v386 = vld [vmem:[#allocation6 + $0x38] sm:$0xff]
        %v387 = vld [vmem:[%s2] sm:$0x1]
        %v389 = vperm.slane %v387, 0
        %vm391 = vcmask 523264
        %v393 = vsel %vm391, %v377, 0
        %v396 = vsel %vm391, %v378, 0
        %398 = vmatpush.msra.mxu0 0.0
        %399 = vmatpush.msra.mxu0 0.0
        %400 = vmatpush.msra.mxu0 0.0
        %401 = vmatpush.msra.mxu0 0.0
        %402 = vmatpush.msra.mxu0 0.0
        %403 = vmatpush.msra.mxu0 0.0
        %404 = vmatpush.msra.mxu0 0.0
        %405 = vmatpush.msra.mxu0 0.0
        %406 = vmatpush.msra.mxu0 %v386
        %407 = vmatpush.msra.mxu0 %v385
        %408 = vmatpush.msra.mxu0 %v384
        %409 = vmatpush.msra.mxu0 %v383
        %410 = vmatpush.msra.mxu0 %v382
        %411 = vmatpush.msra.mxu0 %v381
        %412 = vmatpush.msra.mxu0 %v380
        %413 = vmatpush.msra.mxu0 %v379
        %414 = vmatmul.f32.gmra.mxu0 %v393
        %v415 = vpop.f32.mrf.mxu0
        %v416 = vadd.f32 %v389, %v415
        %417 = vmatmul.f32.gmra.mxu0 %v396
        %v418 = vpop.f32.mrf.mxu0
        %v419 = vadd.f32 %v389, %v418
        %420 = vdwg.mxu0
        %421 = vst [vmem:[%s226] sm:$0xff] %v416
        %422 = vst [vmem:[%s226 + $0x8] sm:$0xff] %v419
        %s423 = sand.u32 %s113, 1
        %s424 = scalar_lea.sflag [#allocation5], %s423
        %s425 = sand.u32 %s113, 1
        %s426 = smul.addr %s425, 16
        %s427 = scalar_lea.vmem [#allocation8], %s426
        // Predicated region
        $region48: #{tpu_custom_call.1} parent=31 // pred_check
          %p428 = pneg %p123
        $region49: #{tpu_custom_call.1} parent=31 // pred_check_branch
          %430 = sbr.rel (%p428) target = $region51
        $region50: #{tpu_custom_call.1} parent=31 // pred_region
          %s431 = smul.u32 2, %s26
          %433 = vsyncadd %s424, 0
          %s434 = smul.addr %s25, 2
          %s435 = sadd.s32 %s431, %s434
          %s436 = smul.addr %s435, 8
          %s437 = scalar_lea.hbm %s3, %s436
          %s438 = sshll.u32 %s427, 4
          %s439 = int_to_ptr.vmem [resolvable:$true] %s438
          %s440 = sshll.u32 %s437, 4
          %s441 = int_to_ptr.hbm [resolvable:$true] %s440
          %446 = dma.vmem_to_hbm [thread:$0]  %s439, 256, %s441, %s424, 128, 128, 8
        $region51: #{tpu_custom_call.1} parent=31 // pred_fallthru
          _
      $region32: #{tpu_custom_call.1} parent=5 // pred_fallthru
        _
      %p447 = scmp.le.s32.totalorder 2, %s16
      // Predicated region
      $region52: #{tpu_custom_call.1} parent=5 // pred_check
        %p448 = pneg %p447
      $region53: #{tpu_custom_call.1} parent=5 // pred_check_branch
        %450 = sbr.rel (%p448) target = $region55
      $region54: #{tpu_custom_call.1} parent=5 // pred_region
        %s451 = ssub.s32 %s16, 2
        // Predicated region
        $region56: #{tpu_custom_call.1} parent=54 // pred_check
          %p452 = pneg %p129
        $region57: #{tpu_custom_call.1} parent=54 // pred_check_branch
          %454 = sbr.rel (%p452) target = $region59
        $region58: #{tpu_custom_call.1} parent=54 // pred_region
          %s455 = sand.u32 %s114, 1
          %s456 = scalar_lea.sflag [#allocation5], %s455
          %s457 = sand.u32 %s114, 1
          %s458 = smul.addr %s457, 16
          %s459 = scalar_lea.vmem [#allocation8], %s458
          %461 = dma.done %s456, 256
        $region59: #{tpu_custom_call.1} parent=54 // pred_fallthru
          _
      $region55: #{tpu_custom_call.1} parent=5 // pred_fallthru
        _
    $region6: #{tpu_custom_call.1} parent=1 // loop_footer
      %s20 = sadd.s32 1, %s16
    $region7: #{tpu_custom_call.1} parent=1 // loop_footer_branch
      %15 = sbr.rel target = $region3
    $region8: #{tpu_custom_call.1} parent=1 // loop_exit
      _
    %462 = vsyncpa [#allocation4], 1
    %s463 = scalar_lea.sflag [#allocation4], 1
    %464 = vsyncpa %s463, 1
    %465 = vsyncpa [#allocation7], 1
    %466 = vsyncpa [#allocation5], 1
    %s467 = scalar_lea.sflag [#allocation5], 1
    %468 = vsyncpa %s467, 1

</llo_original>
